<compile_context>
chip_gen: v5e
topology: v5e:2x2
jax: 0.10.0
libtpu: 0.0.40
codegen_flags: <defaults>
</compile_context>

<pallas_src>
import functools

import jax
import jax.numpy as jnp
from jax.experimental import pallas as pl
from jax.experimental.pallas import tpu as pltpu

_NEG_BIG = -1e30  # bias value for padded action lanes (kills them in softmax)


def _actdist_kernel(x_ref, w_ref, b_ref, logits_ref, lse_ref):
    # x: (TB, H) f32 -> cast to bf16 for the MXU; w: (H, A_pad) bf16 (resident)
    # b: (1, A_pad) f32, padded lanes hold _NEG_BIG.
    x = x_ref[...].astype(jnp.bfloat16)
    w = w_ref[...]
    b = b_ref[...]
    logits = jnp.dot(x, w, preferred_element_type=jnp.float32) + b  # (TB, A_pad)
    # Numerically-stable logsumexp over the (padded) action axis; padded lanes
    # contribute exp(-1e30 - m) == 0 so the stats match the unpadded softmax.
    m = jnp.max(logits, axis=-1, keepdims=True)
    e = jnp.exp(logits - m)
    s = jnp.sum(e, axis=-1, keepdims=True)
    logits_ref[...] = logits
    lse_ref[...] = m + jnp.log(s)


@functools.partial(jax.jit, static_argnums=(3,))
def _actdist_forward(x, w_pad, b_pad, num_actions):
    """Fused Linear + Categorical-normalization.

    x:     (B, H)      float32
    w_pad: (H, A_pad)  bfloat16  (transposed, action axis zero-padded to 128k)
    b_pad: (1, A_pad)  float32   (padded lanes = _NEG_BIG)
    returns (logits (B, A) f32, lse (B, 1) f32)
    """
    B, H = x.shape
    A_pad = w_pad.shape[1]

    # Batch tile: big enough to amortize per-step overhead, tiny VMEM footprint
    # (bf16 x-block + f32 out-block, double-buffered, plus resident w/b).
    TB = min(512, B)
    grid = (pl.cdiv(B, TB),)

    logits_pad, lse = pl.pallas_call(
        _actdist_kernel,
        out_shape=(
            jax.ShapeDtypeStruct((B, A_pad), jnp.float32),
            jax.ShapeDtypeStruct((B, 1), jnp.float32),
        ),
        grid_spec=pltpu.PrefetchScalarGridSpec(
            num_scalar_prefetch=0,
            grid=grid,
            in_specs=[
                pl.BlockSpec((TB, H), lambda i: (i, 0)),       # x: tiled over B
                pl.BlockSpec((H, A_pad), lambda i: (0, 0)),    # w: resident
                pl.BlockSpec((1, A_pad), lambda i: (0, 0)),    # b: resident
            ],
            out_specs=(
                pl.BlockSpec((TB, A_pad), lambda i: (i, 0)),   # lane-dense logits
                pl.BlockSpec((TB, 1), lambda i: (i, 0)),       # per-row logsumexp
            ),
        ),
        compiler_params=pltpu.CompilerParams(
            dimension_semantics=("parallel",),
        ),
    )(x, w_pad, b_pad)

    return logits_pad[:, :num_actions], lse


class CustomCategoricalJax:
    """JAX equivalent of CustomCategorical, built lazily from (logits, lse)."""

    def __init__(self, logits, lse):
        self._logits = logits  # (B, A) raw logits
        self._lse = lse        # (B, 1) logsumexp(logits)

    @property
    def logits(self):
        return self._logits

    @property
    def log_p(self):
        # normalized log-probabilities (torch Categorical .logits)
        return self._logits - self._lse

    @property
    def probs(self):
        return jnp.exp(self._logits - self._lse)

    def sample(self, key):
        # torch: Categorical.sample().unsqueeze(-1) -> (B, 1)
        s = jax.random.categorical(key, self._logits, axis=-1)
        return s[:, None]

    def log_probs(self, actions):
        # torch: log_prob(actions.squeeze(-1)).view(B, -1).sum(-1).unsqueeze(-1)
        a = jnp.squeeze(actions, axis=-1)                          # (B,)
        lp = jnp.take_along_axis(self.log_p, a[:, None], axis=-1)  # (B, 1)
        return lp.reshape(actions.shape[0], -1).sum(-1)[:, None]   # (B, 1)

    def deterministic_sample(self):
        # argmax(probs) == argmax(logits)
        return jnp.argmax(self._logits, axis=-1, keepdims=True)


class CategoricalActDist:
    """Pallas-backed port of drl.policies.distributions.CategoricalActDist."""

    def __init__(self, num_inputs: int, num_outputs: int, key=None):
        if key is None:
            key = jax.random.PRNGKey(0)
        kw, kb = jax.random.split(key)
        self.num_outputs = num_outputs
        # nn.Linear default init: U(-1/sqrt(fan_in), 1/sqrt(fan_in)).
        bound = 1.0 / (num_inputs ** 0.5)
        # Keep f32 (H, A) weight / (1, A) bias for reference checks.
        self.w_t = jax.random.uniform(
            kw, (num_inputs, num_outputs), jnp.float32, -bound, bound)
        self.b = jax.random.uniform(
            kb, (1, num_outputs), jnp.float32, -bound, bound)
        # Kernel-side params: action axis padded to a multiple of 128 so all
        # output stores / writeback DMAs are lane-dense; weight stored bf16.
        a_pad = 128 * pl.cdiv(num_outputs, 128)
        w_pad = jnp.zeros((num_inputs, a_pad), jnp.float32)
        w_pad = w_pad.at[:, :num_outputs].set(self.w_t)
        self._w_pad = w_pad.astype(jnp.bfloat16)
        b_pad = jnp.full((1, a_pad), _NEG_BIG, jnp.float32)
        self._b_pad = b_pad.at[:, :num_outputs].set(self.b)

    def __call__(self, x):
        logits, lse = _actdist_forward(x, self._w_pad, self._b_pad,
                                       self.num_outputs)
        return CustomCategoricalJax(logits, lse)


if __name__ == "__main__":
    B, H, A = 8, 32, 6  # batch, hidden (num_inputs), num actions (num_outputs)

    root = jax.random.PRNGKey(0)
    k_x, k_params, k_sample = jax.random.split(root, 3)

    x = jax.random.normal(k_x, (B, H), dtype=jnp.float32)

    act_dist = CategoricalActDist(num_inputs=H, num_outputs=A, key=k_params)
    dist = act_dist(x)

    logits = jax.block_until_ready(dist.logits)
    probs = jax.block_until_ready(dist.probs)
    log_p = jax.block_until_ready(dist.log_p)

    # Exercise the distribution API (plain JAX glue on kernel outputs).
    det = jax.block_until_ready(dist.deterministic_sample())   # (B, 1)
    samp = jax.block_until_ready(dist.sample(k_sample))        # (B, 1)
    lp = jax.block_until_ready(dist.log_probs(samp))           # (B, 1)

    # Cross-check against a plain-JAX reference using the same bf16-rounded
    # operands the kernel's MXU path sees (f32 accumulation).
    x_bf = x.astype(jnp.bfloat16).astype(jnp.float32)
    w_bf = act_dist.w_t.astype(jnp.bfloat16).astype(jnp.float32)
    ref_logits = x_bf @ w_bf + act_dist.b
    ref_probs = jax.nn.softmax(ref_logits, axis=-1)
    ref_logp = jax.nn.log_softmax(ref_logits, axis=-1)
    assert jnp.allclose(logits, ref_logits, atol=2e-3, rtol=2e-3)
    assert jnp.allclose(probs, ref_probs, atol=2e-3, rtol=2e-3)
    assert jnp.allclose(log_p, ref_logp, atol=2e-3, rtol=2e-3)
    # Loose parity check vs the full-f32 (torch-like) linear as well.
    ref_f32 = x @ act_dist.w_t + act_dist.b
    assert jnp.allclose(logits, ref_f32, atol=5e-2, rtol=5e-2)
    assert det.shape == (B, 1) and samp.shape == (B, 1) and lp.shape == (B, 1)

    print("KERNEL_OK")
</pallas_src>

<mosaic_0001>
module attributes {stable_mosaic.version = 11 : i64} {
  func.func @_actdist_kernel(%arg0: i32, %arg1: memref<8x32xf32, #tpu.memory_space<vmem>>, %arg2: memref<32x128xbf16, #tpu.memory_space<vmem>>, %arg3: memref<1x128xf32, #tpu.memory_space<vmem>>, %arg4: memref<8x128xf32, #tpu.memory_space<vmem>>, %arg5: memref<8x1xf32, #tpu.memory_space<vmem>>) attributes {dimension_semantics = [#tpu.dimension_semantics<parallel>], iteration_bounds = array<i64: 1>, scalar_prefetch = 0 : i64, scratch_operands = 0 : i64, tpu.core_type = #tpu.core_type<tc>, window_params = [{transform_indices = @transform_0, window_bounds = array<i64: 8, 32>}, {pipeline_mode = #tpu.pipeline_mode<synchronous>, transform_indices = @transform_1, window_bounds = array<i64: 32, 128>}, {pipeline_mode = #tpu.pipeline_mode<synchronous>, transform_indices = @transform_2, window_bounds = array<i64: 1, 128>}, {transform_indices = @transform_3, window_bounds = array<i64: 8, 128>}, {transform_indices = @transform_4, window_bounds = array<i64: 8, 1>}]} {
    %c0 = arith.constant 0 : index
    %c0_0 = arith.constant 0 : index
    %0 = vector.load %arg1[%c0, %c0_0] : memref<8x32xf32, #tpu.memory_space<vmem>>, vector<8x32xf32>
    %1 = arith.truncf %0 : vector<8x32xf32> to vector<8x32xbf16>
    %c0_1 = arith.constant 0 : index
    %c0_2 = arith.constant 0 : index
    %2 = vector.load %arg2[%c0_1, %c0_2] : memref<32x128xbf16, #tpu.memory_space<vmem>>, vector<32x128xbf16>
    %c0_3 = arith.constant 0 : index
    %c0_4 = arith.constant 0 : index
    %3 = vector.load %arg3[%c0_3, %c0_4] : memref<1x128xf32, #tpu.memory_space<vmem>>, vector<1x128xf32>
    %cst = arith.constant dense<0.000000e+00> : vector<8x128xf32>
    %4 = tpu.matmul %1, %2, %cst {dimension_numbers = #tpu.dot_dimension_numbers<[1], [0], [0], [1], [0, 0, 1, 1], [], []>} : vector<8x32xbf16>, vector<32x128xbf16>, vector<8x128xf32> -> vector<8x128xf32>
    %5 = vector.broadcast %3 : vector<1x128xf32> to vector<8x128xf32>
    %6 = arith.addf %4, %5 : vector<8x128xf32>
    %cst_5 = arith.constant dense<0xFF800000> : vector<8xf32>
    %7 = vector.multi_reduction <maximumf>, %6, %cst_5 [1] : vector<8x128xf32> to vector<8xf32>
    %8 = vector.shape_cast %7 : vector<8xf32> to vector<8x1xf32>
    %9 = vector.broadcast %8 : vector<8x1xf32> to vector<8x128xf32>
    %10 = arith.subf %6, %9 : vector<8x128xf32>
    %11 = math.exp %10 : vector<8x128xf32>
    %cst_6 = arith.constant dense<0.000000e+00> : vector<8xf32>
    %12 = vector.multi_reduction <add>, %11, %cst_6 [1] : vector<8x128xf32> to vector<8xf32>
    %13 = vector.shape_cast %12 : vector<8xf32> to vector<8x1xf32>
    %c0_7 = arith.constant 0 : index
    %c0_8 = arith.constant 0 : index
    %14 = vector.load %arg4[%c0_7, %c0_8] : memref<8x128xf32, #tpu.memory_space<vmem>>, vector<8x128xf32>
    tpu.vector_store %arg4[%c0_7, %c0_8], %6 {strides = array<i32>} : memref<8x128xf32, #tpu.memory_space<vmem>>, vector<8x128xf32>,
    %15 = math.log %13 : vector<8x1xf32>
    %16 = arith.addf %8, %15 : vector<8x1xf32>
    %c0_9 = arith.constant 0 : index
    %c0_10 = arith.constant 0 : index
    %17 = vector.load %arg5[%c0_9, %c0_10] : memref<8x1xf32, #tpu.memory_space<vmem>>, vector<8x1xf32>
    tpu.vector_store %arg5[%c0_9, %c0_10], %16 {strides = array<i32>} : memref<8x1xf32, #tpu.memory_space<vmem>>, vector<8x1xf32>,
    return
  }
  func.func @transform_0(%arg0: i32) -> (i32, i32) {
    %c0_i32 = arith.constant 0 : i32
    %c0_i32_0 = arith.constant 0 : i32
    return %arg0, %c0_i32 : i32, i32
  }
  func.func @transform_1(%arg0: i32) -> (i32, i32) {
    %c0_i32 = arith.constant 0 : i32
    %c0_i32_0 = arith.constant 0 : i32
    %c0_i32_1 = arith.constant 0 : i32
    return %c0_i32, %c0_i32_0 : i32, i32
  }
  func.func @transform_2(%arg0: i32) -> (i32, i32) {
    %c0_i32 = arith.constant 0 : i32
    %c0_i32_0 = arith.constant 0 : i32
    %c0_i32_1 = arith.constant 0 : i32
    return %c0_i32, %c0_i32_0 : i32, i32
  }
  func.func @transform_3(%arg0: i32) -> (i32, i32) {
    %c0_i32 = arith.constant 0 : i32
    %c0_i32_0 = arith.constant 0 : i32
    return %arg0, %c0_i32 : i32, i32
  }
  func.func @transform_4(%arg0: i32) -> (i32, i32) {
    %c0_i32 = arith.constant 0 : i32
    %c0_i32_0 = arith.constant 0 : i32
    return %arg0, %c0_i32 : i32, i32
  }
}

</mosaic_0001>

<llo_original>
// kernel: _actdist_forward.1
$region0: #{_actdist_forward.1}
  #allocation0 [shape = 'u32[]', space=smem, size = 0x4, offset = 0x4, fixed_abs, tag = 'smem constant byte address 0x4 - core index']
  #allocation1 [shape = 'u32[72,128]{1,0:T(1,128)}', space=vmem, size = 0x9000, scoped, tag = 'internal scratch']
  %s0 = inlined_call_operand.hbm [shape: f32[8,32], index: 0, kind: input, shape index: {}]
  %s1 = inlined_call_operand.hbm [shape: bf16[32,128], index: 1, kind: input, shape index: {}]
  %s2 = inlined_call_operand.vmem [shape: f32[1,128], index: 2, kind: input, shape index: {}]
  %s3 = inlined_call_operand.hbm [shape: f32[8,128], index: 3, kind: output, shape index: {0}]
  %s4 = inlined_call_operand.vmem [shape: f32[8,1], index: 4, kind: output, shape index: {1}]
  %5 = xla_tuple %s3, %s4
  %s6 = sld [smem:[#allocation0]]
  $region38: #{_actdist_forward.1} parent=0
    _
  %s8 = ssub.s32 1, %s6
  %s9 = scalar_select 0, %s8, %s6
  $region1: #{_actdist_forward.1} parent=0
    #allocation2 [shape = 'u8[4096]{0}', space=vmem, size = 0x1000, scoped, tag = 'input window, operand 0, single buffered']
    #allocation3 [shape = 's32[1]{0}', space=sflag, size = 0x4, scoped, tag = 'scoped memory for _actdist_forward.1']
    #allocation4 [shape = 's32[1]{0}', space=sflag, size = 0x4, scoped, tag = 'scoped memory for _actdist_forward.1']
    #allocation5 [shape = 'u8[8192]{0}', space=vmem, size = 0x2000, scoped, tag = 'input window, operand 1, single buffered']
    #allocation6 [shape = 's32[1]{0}', space=sflag, size = 0x4, scoped, tag = 'scoped memory for _actdist_forward.1']
    #allocation7 [shape = 'u8[4096]{0}', space=vmem, size = 0x1000, scoped, tag = 'output window, operand 0, single buffered']
    %10 = vsyncpa [#allocation3], 0
    %11 = vsyncpa [#allocation6], 0
    %12 = vsyncpa [#allocation4], 0
    // Predicated region
    $region2: #{_actdist_forward.1} parent=1 // pred_check
      _
    $region3: #{_actdist_forward.1} parent=1 // pred_check_branch
      %14 = sbr.rel (0) target = $region5
    $region4: #{_actdist_forward.1} parent=1 // pred_region
      %16 = vsyncadd [#allocation3], 0
      %s18 = sshll.u32 %s0, 4
      %s19 = int_to_ptr.hbm [resolvable:$true] %s18
      %s20 = sshll.u32 [#allocation2], 4
      %s21 = int_to_ptr.vmem [resolvable:$true] %s20
      %23 = dma.hbm_to_vmem [thread:$0]  %s19, 128, %s21, [#allocation3]
    $region5: #{_actdist_forward.1} parent=1 // pred_fallthru
      _
    // Predicated region
    $region6: #{_actdist_forward.1} parent=1 // pred_check
      _
    $region7: #{_actdist_forward.1} parent=1 // pred_check_branch
      %25 = sbr.rel (0) target = $region9
    $region8: #{_actdist_forward.1} parent=1 // pred_region
      %27 = vsyncadd [#allocation6], 0
      %s28 = sshll.u32 %s1, 4
      %s29 = int_to_ptr.hbm [resolvable:$true] %s28
      %s30 = sshll.u32 [#allocation5], 4
      %s31 = int_to_ptr.vmem [resolvable:$true] %s30
      %36 = dma.hbm_to_vmem [thread:$0]  %s29, 256, %s31, [#allocation6], 64, 64, 4
    $region9: #{_actdist_forward.1} parent=1 // pred_fallthru
      _
    // Predicated region
    $region10: #{_actdist_forward.1} parent=1 // pred_check
      _
    $region11: #{_actdist_forward.1} parent=1 // pred_check_branch
      %38 = sbr.rel (0) target = $region13
    $region12: #{_actdist_forward.1} parent=1 // pred_region
      _
    $region13: #{_actdist_forward.1} parent=1 // pred_fallthru
      _
    // Predicated region
    $region14: #{_actdist_forward.1} parent=1 // pred_check
      _
    $region15: #{_actdist_forward.1} parent=1 // pred_check_branch
      %40 = sbr.rel (0) target = $region17
    $region16: #{_actdist_forward.1} parent=1 // pred_region
      %42 = dma.done [#allocation3], 128
    $region17: #{_actdist_forward.1} parent=1 // pred_fallthru
      _
    // Predicated region
    $region18: #{_actdist_forward.1} parent=1 // pred_check
      _
    $region19: #{_actdist_forward.1} parent=1 // pred_check_branch
      %44 = sbr.rel (0) target = $region21
    $region20: #{_actdist_forward.1} parent=1 // pred_region
      %46 = dma.done [#allocation6], 256
    $region21: #{_actdist_forward.1} parent=1 // pred_fallthru
      _
    %v48 = vld [vmem:[#allocation2] sm:$0xff]
    %v49 = vpack.c.bf16 %v48, %v48
    %v50 = vld [vmem:[#allocation5] sm:$0xf]
    %v51 = vld [vmem:[#allocation5 + $0x4] sm:$0xf]
    %v52 = vld [vmem:[#allocation5 + $0x8] sm:$0xf]
    %v53 = vld [vmem:[#allocation5 + $0xc] sm:$0xf]
    %v54 = vld [vmem:[%s2] sm:$0x1]
    %v56 = vperm.slane %v54, 0
    %v62 = vunpack.c.l.b16 %v50
    %v63 = vunpack.c.l.b16 %v51
    %v64 = vunpack.c.l.b16 %v52
    %v65 = vunpack.c.l.b16 %v53
    %v66 = vpack.c.b16 %v63, %v62
    %v67 = vpack.c.b16 %v65, %v64
    %vm70 = vcmask 261120
    %v72 = vsel %vm70, %v49, 0
    %74 = vmatpush.bf16.msra.mxu0 0
    %75 = vmatpush.bf16.msra.mxu0 0
    %76 = vmatpush.bf16.msra.mxu0 0
    %77 = vmatpush.bf16.msra.mxu0 0
    %78 = vmatpush.bf16.msra.mxu0 0
    %79 = vmatpush.bf16.msra.mxu0 0
    %80 = vmatpush.bf16.msra.mxu0 %v67
    %81 = vmatpush.bf16.msra.mxu0 %v66
    %82 = vmatmul.bf16.gmra.mxu0 %v72
    %v83 = vpop.f32.mrf.mxu0
    %v84 = vadd.f32 %v56, %v83
    %v85 = vpop.f32.mrf.mxu0
    %86 = vdwg.mxu0
    %87 = vmax.xlane.f32.xlu0 %v84
    %v88 = vpop.xlane.xlu0 %87
    %v89 = vsub.f32 %v84, %v88
    %v90 = vmul.f32 %v89, 1.442695
    %v91 = vpow.pop %v90
    %92 = vadd.xlane.f32.xlu0 %v91
    %v93 = vpop.xlane.xlu0 %92
    %94 = vst [vmem:[#allocation7] sm:$0xff] %v84
    %v95 = vlog2.pop %v93
    %v96 = vmul.f32 %v95, 0.6931472
    %v97 = vadd.f32 %v88, %v96
    %vm98 = vcmask 7168
    %99 = vst.msk [vmem:[%s4] sm:$0xff] %vm98, %v97
    // Predicated region
    $region22: #{_actdist_forward.1} parent=1 // pred_check
      _
    $region23: #{_actdist_forward.1} parent=1 // pred_check_branch
      %101 = sbr.rel (0) target = $region25
    $region24: #{_actdist_forward.1} parent=1 // pred_region
      %103 = vsyncadd [#allocation4], 0
      %s105 = sshll.u32 [#allocation7], 4
      %s106 = int_to_ptr.vmem [resolvable:$true] %s105
      %s107 = sshll.u32 %s3, 4
      %s108 = int_to_ptr.hbm [resolvable:$true] %s107
      %110 = dma.vmem_to_hbm [thread:$0]  %s106, 128, %s108, [#allocation4]
    $region25: #{_actdist_forward.1} parent=1 // pred_fallthru
      _
    // Predicated region
    $region26: #{_actdist_forward.1} parent=1 // pred_check
      _
    $region27: #{_actdist_forward.1} parent=1 // pred_check_branch
      %112 = sbr.rel (0) target = $region29
    $region28: #{_actdist_forward.1} parent=1 // pred_region
      _
    $region29: #{_actdist_forward.1} parent=1 // pred_fallthru
      _
    // Predicated region
    $region30: #{_actdist_forward.1} parent=1 // pred_check
      _
    $region31: #{_actdist_forward.1} parent=1 // pred_check_branch
      %114 = sbr.rel (0) target = $region33
    $region32: #{_actdist_forward.1} parent=1 // pred_region
      %116 = dma.done [#allocation4], 128
    $region33: #{_actdist_forward.1} parent=1 // pred_fallthru
      _
    // Predicated region
    $region34: #{_actdist_forward.1} parent=1 // pred_check
      _
    $region35: #{_actdist_forward.1} parent=1 // pred_check_branch
      %118 = sbr.rel (0) target = $region37
    $region36: #{_actdist_forward.1} parent=1 // pred_region
      _
    $region37: #{_actdist_forward.1} parent=1 // pred_fallthru
      _
    %119 = vsyncpa [#allocation3], 1
    %120 = vsyncpa [#allocation6], 1
    %121 = vsyncpa [#allocation4], 1

</llo_original>
